<compile_context>
chip_gen: v6e
topology: v6e:2x2x1
jax: 0.10.0
libtpu: 0.0.40
codegen_flags: <defaults>
</compile_context>

<pallas_src>
import jax
import jax.numpy as jnp
from jax.experimental import pallas as pl
from jax.experimental.pallas import tpu as pltpu


def _round_up(n, m):
    return ((n + m - 1) // m) * m


def _affine_kernel(x_ref, p_ref, y_ref):
    # y = x * scale + shift ; p_ref is a (2, D) slab: row 0 = scale, row 1 = shift.
    y_ref[...] = x_ref[...] * p_ref[0:1, :] + p_ref[1:2, :]


def _run_affine(x, params, *, block_rows=None):
    """Tiled element-wise affine transform y = x * params[0] + params[1] on TPU."""
    B, D = x.shape
    itemsize = jnp.dtype(x.dtype).itemsize
    sublane = 8 * max(1, 4 // itemsize)  # 8 rows f32, 16 bf16, 32 int8/fp8

    # ~2 MiB batch tiles: double-buffered in+out (~8 MiB) stays well under the
    # scoped-VMEM limit on v5e/v6e/v7x while sitting on the mem-bound plateau.
    if block_rows is None:
        target_bytes = 2 * 1024 * 1024
        block_rows = (target_bytes // (D * itemsize)) // sublane * sublane
    block_rows = int(block_rows)
    block_rows = max(sublane, _round_up(block_rows, sublane))

    # Guarantee >= 4 grid steps when B allows it: engages both v7x TensorCores
    # via the parallel batch axis and keeps the software pipeline busy.
    min_steps = 4
    cap = max(sublane, _round_up(pl.cdiv(B, min_steps), sublane))
    block_rows = min(block_rows, cap)

    grid = (pl.cdiv(B, block_rows),)

    # No explicit padding: Pallas drops out-of-bounds output rows of the ragged
    # last block on store; the matching (undefined) input rows only feed an
    # elementwise FMA whose results are discarded, so this is safe.
    return pl.pallas_call(
        _affine_kernel,
        out_shape=jax.ShapeDtypeStruct((B, D), x.dtype),
        grid_spec=pltpu.PrefetchScalarGridSpec(
            num_scalar_prefetch=0,
            grid=grid,
            in_specs=[
                pl.BlockSpec((block_rows, D), lambda i: (i, 0)),
                pl.BlockSpec((2, D), lambda i: (0, 0)),   # packed scale/shift slab
            ],
            out_specs=pl.BlockSpec((block_rows, D), lambda i: (i, 0)),
        ),
        compiler_params=pltpu.CompilerParams(
            dimension_semantics=("parallel",),   # shards batch tiles across TCs on v7x
            vmem_limit_bytes=32 * 1024 * 1024,
        ),
    )(x, params)


class FlowPallas:
    """Mirrors torch `Flow.forward` / `Flow.reverse` dispatch semantics."""

    def __init__(self, dim, dtype=jnp.float32, block_rows=None,
                 min_pallas_bytes=4 * 1024 * 1024):
        # Deterministic synthetic parameters (shapes follow the feature dim).
        d = jnp.arange(dim, dtype=jnp.float32)
        s = 0.01 * jnp.sin(d)
        t = 0.05 * jnp.cos(d)
        self.s = s.reshape(1, dim).astype(dtype)   # log-scale
        self.t = t.reshape(1, dim).astype(dtype)   # shift
        self._block_rows = block_rows
        self._min_pallas_bytes = int(min_pallas_bytes)

        # Hoisted, data-independent quantities (computed once, in float32 math),
        # packed as (2, D) slabs: row 0 = scale, row 1 = shift.
        fwd_scale = jnp.exp(s)
        inv_scale = jnp.exp(-s)
        self._fwd_params = jnp.stack([fwd_scale, t]).astype(dtype)
        self._inv_params = jnp.stack([inv_scale, -t * inv_scale]).astype(dtype)
        self._log_det = jnp.sum(s)                 # float32 scalar, = sum(log-scale)

    # --- concrete bijector (Pallas hot path) ---------------------------------
    def _affine(self, x, params):
        B, D = x.shape
        nbytes = B * D * jnp.dtype(x.dtype).itemsize
        if nbytes < self._min_pallas_bytes or D % 128 != 0:
            # Small problems (or non-lane-dense D): XLA's fused elementwise FMA
            # already hits the HBM roofline; skip the custom-call overhead.
            return x * params[0:1, :] + params[1:2, :]
        return _run_affine(x, params, block_rows=self._block_rows)

    def _forward(self, x, **kwargs):
        y = self._affine(x, self._fwd_params)
        log_det = jnp.full((x.shape[0], 1), self._log_det, dtype=jnp.float32)
        return y, log_det

    def _inverse(self, z, **kwargs):
        x = self._affine(z, self._inv_params)
        log_det = jnp.full((z.shape[0], 1), -self._log_det, dtype=jnp.float32)
        return x, log_det

    # --- base-class dispatch, reproduced exactly -----------------------------
    def forward(self, *xs, inverse=False, **kwargs):
        if inverse:
            return self._inverse(*xs, **kwargs)
        else:
            return self._forward(*xs, **kwargs)

    def __call__(self, *xs, **kwargs):
        return self.forward(*xs, **kwargs)

    def reverse(self, *xs, **kwargs):
        output, _ = self.forward(*xs, inverse=True, **kwargs)
        return output


if __name__ == "__main__":
    # Lane-dense feature dim (multiple of 128); batch small (1 MiB total) but
    # large enough to give 4 batch tiles once block_rows is capped for >=4 steps.
    # min_pallas_bytes=0 forces the Pallas path so the kernel is exercised here.
    B, D = 2048, 128
    key = jax.random.PRNGKey(0)
    x = jax.random.normal(key, (B, D), dtype=jnp.float32)

    flow = FlowPallas(D, min_pallas_bytes=0)

    # forward pass: (z, log_det)
    z, log_det = flow(x)
    # inverse dispatch path via reverse(): drops log-det, returns x-hat
    x_rec = flow.reverse(z)
    jax.block_until_ready((z, log_det, x_rec))

    # sanity: matches analytic affine, inverse undoes forward, f32 log-det
    z_ref = x * jnp.exp(flow.s) + flow.t
    assert jnp.allclose(z, z_ref, atol=1e-5), "forward mismatch vs reference"
    assert jnp.allclose(x_rec, x, atol=1e-5), "inverse does not undo forward"
    assert log_det.dtype == jnp.float32
    assert jnp.allclose(log_det[:, 0], jnp.sum(flow.s), atol=1e-6)

    # ragged last block (B not a multiple of block_rows) — exercises the
    # masked-store path that replaced the pad/slice round trip.
    B2 = 2050
    x2 = jax.random.normal(jax.random.PRNGKey(2), (B2, D), dtype=jnp.float32)
    z2, _ = flow(x2)
    x2_rec = flow.reverse(z2)
    jax.block_until_ready((z2, x2_rec))
    assert jnp.allclose(z2, x2 * jnp.exp(flow.s) + flow.t, atol=1e-5)
    assert jnp.allclose(x2_rec, x2, atol=1e-5)

    # tiny-problem path (plain-XLA fallback, default byte threshold) still
    # honors the same semantics
    flow_small = FlowPallas(32)
    x_small = jax.random.normal(jax.random.PRNGKey(1), (2, 32), dtype=jnp.float32)
    z_s, ld_s = flow_small(x_small)
    x_s_rec = flow_small.reverse(z_s)
    jax.block_until_ready((z_s, ld_s, x_s_rec))
    assert jnp.allclose(x_s_rec, x_small, atol=1e-5)

    print("KERNEL_OK")
</pallas_src>

<mosaic_0001>
module attributes {stable_mosaic.version = 11 : i64} {
  func.func @_affine_kernel(%arg0: i32, %arg1: memref<512x128xf32, #tpu.memory_space<vmem>>, %arg2: memref<2x128xf32, #tpu.memory_space<vmem>>, %arg3: memref<512x128xf32, #tpu.memory_space<vmem>>) attributes {dimension_semantics = [#tpu.dimension_semantics<parallel>], iteration_bounds = array<i64: 4>, scalar_prefetch = 0 : i64, scratch_operands = 0 : i64, tpu.core_type = #tpu.core_type<tc>, window_params = [{transform_indices = @transform_0, window_bounds = array<i64: 512, 128>}, {pipeline_mode = #tpu.pipeline_mode<synchronous>, transform_indices = @transform_1, window_bounds = array<i64: 2, 128>}, {transform_indices = @transform_2, window_bounds = array<i64: 512, 128>}]} {
    %c0 = arith.constant 0 : index
    %c0_0 = arith.constant 0 : index
    %0 = vector.load %arg1[%c0, %c0_0] : memref<512x128xf32, #tpu.memory_space<vmem>>, vector<512x128xf32>
    %c0_1 = arith.constant 0 : index
    %c0_2 = arith.constant 0 : index
    %1 = vector.load %arg2[%c0_1, %c0_2] : memref<2x128xf32, #tpu.memory_space<vmem>>, vector<1x128xf32>
    %2 = vector.broadcast %1 : vector<1x128xf32> to vector<512x128xf32>
    %3 = arith.mulf %0, %2 : vector<512x128xf32>
    %c1 = arith.constant 1 : index
    %c0_3 = arith.constant 0 : index
    %4 = vector.load %arg2[%c1, %c0_3] : memref<2x128xf32, #tpu.memory_space<vmem>>, vector<1x128xf32>
    %5 = vector.broadcast %4 : vector<1x128xf32> to vector<512x128xf32>
    %6 = arith.addf %3, %5 : vector<512x128xf32>
    %c0_4 = arith.constant 0 : index
    %c0_5 = arith.constant 0 : index
    %7 = vector.load %arg3[%c0_4, %c0_5] : memref<512x128xf32, #tpu.memory_space<vmem>>, vector<512x128xf32>
    tpu.vector_store %arg3[%c0_4, %c0_5], %6 {strides = array<i32>} : memref<512x128xf32, #tpu.memory_space<vmem>>, vector<512x128xf32>,
    return
  }
  func.func @transform_0(%arg0: i32) -> (i32, i32) {
    %c0_i32 = arith.constant 0 : i32
    %c0_i32_0 = arith.constant 0 : i32
    return %arg0, %c0_i32 : i32, i32
  }
  func.func @transform_1(%arg0: i32) -> (i32, i32) {
    %c0_i32 = arith.constant 0 : i32
    %c0_i32_0 = arith.constant 0 : i32
    %c0_i32_1 = arith.constant 0 : i32
    return %c0_i32, %c0_i32_0 : i32, i32
  }
  func.func @transform_2(%arg0: i32) -> (i32, i32) {
    %c0_i32 = arith.constant 0 : i32
    %c0_i32_0 = arith.constant 0 : i32
    return %arg0, %c0_i32 : i32, i32
  }
}

</mosaic_0001>

<llo_original>
// kernel: tpu_custom_call.1
$region0: #{tpu_custom_call.1}
  #allocation0 [shape = 'u32[]', space=smem, size = 0x4, offset = 0x4, fixed_abs, tag = 'smem constant byte address 0x4 - core index']
  #allocation1 [shape = 'u32[144,128]{1,0:T(1,128)}', space=vmem, size = 0x12000, scoped, tag = 'internal scratch']
  %s0 = inlined_call_operand.hbm [shape: f32[2048,128], index: 0, kind: input, shape index: {}]
  %s1 = inlined_call_operand.hbm [shape: f32[2,128], index: 1, kind: input, shape index: {}]
  %s2 = inlined_call_operand.hbm [shape: f32[2048,128], index: 2, kind: output, shape index: {}]
  %s3 = sld [smem:[#allocation0]]
  $region49: #{tpu_custom_call.1} parent=0
    _
  %s5 = ssub.s32 1, %s3
  %s6 = scalar_select 0, %s5, %s3
  $region1: #{tpu_custom_call.1} parent=0
    #allocation2 [shape = 'u8[524288]{0}', space=vmem, size = 0x80000, scoped, tag = 'input window, operand 0']
    #allocation3 [shape = 's32[2]{0}', space=sflag, size = 0x8, scoped, tag = 'scoped memory for tpu_custom_call.1']
    #allocation4 [shape = 's32[2]{0}', space=sflag, size = 0x8, scoped, tag = 'scoped memory for tpu_custom_call.1']
    #allocation5 [shape = 'u8[1024]{0}', space=vmem, size = 0x400, scoped, tag = 'input window, operand 1, single buffered']
    #allocation6 [shape = 's32[1]{0}', space=sflag, size = 0x4, scoped, tag = 'scoped memory for tpu_custom_call.1']
    #allocation7 [shape = 'u8[524288]{0}', space=vmem, size = 0x80000, scoped, tag = 'output window, operand 0']
    %7 = vsyncpa [#allocation3], 0
    %s8 = scalar_lea.sflag [#allocation3], 1
    %9 = vsyncpa %s8, 0
    %10 = vsyncpa [#allocation6], 0
    %11 = vsyncpa [#allocation4], 0
    %s12 = scalar_lea.sflag [#allocation4], 1
    %13 = vsyncpa %s12, 0
    loop: start=0, step=1, limit=6
    $region2: #{tpu_custom_call.1} parent=1 // loop_pre_header
      _
    $region3: #{tpu_custom_call.1} parent=1 // loop_header
      %s15 = sphi 0, %s19
      %p16 = scmp.ge.s32.totalorder %s15, 6
      %s25 = sphi 0, %s27
      %s28 = sphi 0, %s25
      %s29 = sphi 0, %s28
      %s45 = sphi 0, %s29
      %s49 = sphi 0, %s49
      %s51 = sphi 0, %s49
      %s52 = sphi 0, %s51
      %s66 = sphi 0, %s52
      %s72 = sphi 0, %s74
      %s75 = sphi 0, %s72
      %s76 = sphi 0, %s75
      %s92 = sphi 0, %s76
    $region4: #{tpu_custom_call.1} parent=1 // loop_header_branch
      %18 = sbr.rel (%p16) target = $region8
    $region5: #{tpu_custom_call.1} parent=1 // loop_body
      %s20 = ssub.s32 %s15, 1
      %s21 = ssub.s32 %s15, 2
      %s22 = sadd.s32 %s15, 1
      %s23 = ssub.s32 %s15, %s22
      %p24 = scmp.eq.s32.totalorder %s23, 0
      %s26 = sadd.s32 %s25, 1
      %s27 = scalar_select %p24, %s25, %s26
      %p30 = pneg %p24
      %p31 = scmp.eq.s32.totalorder %s15, 3
      %p32 = por %p30, %p31
      %p33 = scmp.ne.s32.totalorder %s25, %s28
      %p34 = scmp.eq.s32.totalorder %s15, 0
      %p35 = por %p33, %p34
      %p36 = scmp.ne.s32.totalorder %s25, %s28
      %p37 = scmp.eq.s32.totalorder %s20, 3
      %p38 = por %p36, %p37
      %p39 = scmp.ne.s32.totalorder %s28, %s29
      %p40 = scmp.eq.s32.totalorder %s20, 0
      %p41 = por %p39, %p40
      %p42 = scmp.ne.s32.totalorder %s28, %s29
      %p43 = scmp.eq.s32.totalorder %s21, 3
      %p44 = por %p42, %p43
      %p46 = scmp.ne.s32.totalorder %s29, %s45
      %p47 = scmp.eq.s32.totalorder %s21, 0
      %p48 = por %p46, %p47
      %s50 = sadd.s32 %s49, 1
      %p53 = scmp.eq.s32.totalorder %s15, 3
      %p54 = scmp.ne.s32.totalorder %s49, %s51
      %p55 = scmp.eq.s32.totalorder %s15, 0
      %p56 = por %p54, %p55
      %p57 = scmp.ne.s32.totalorder %s49, %s51
      %p58 = scmp.eq.s32.totalorder %s20, 3
      %p59 = por %p57, %p58
      %p60 = scmp.ne.s32.totalorder %s51, %s52
      %p61 = scmp.eq.s32.totalorder %s20, 0
      %p62 = por %p60, %p61
      %p63 = scmp.ne.s32.totalorder %s51, %s52
      %p64 = scmp.eq.s32.totalorder %s21, 3
      %p65 = por %p63, %p64
      %p67 = scmp.ne.s32.totalorder %s52, %s66
      %p68 = scmp.eq.s32.totalorder %s21, 0
      %p69 = por %p67, %p68
      %s70 = ssub.s32 %s15, %s22
      %p71 = scmp.eq.s32.totalorder %s70, 0
      %s73 = sadd.s32 %s72, 1
      %s74 = scalar_select %p71, %s72, %s73
      %p77 = pneg %p71
      %p78 = scmp.eq.s32.totalorder %s15, 3
      %p79 = por %p77, %p78
      %p80 = scmp.ne.s32.totalorder %s72, %s75
      %p81 = scmp.eq.s32.totalorder %s15, 0
      %p82 = por %p80, %p81
      %p83 = scmp.ne.s32.totalorder %s72, %s75
      %p84 = scmp.eq.s32.totalorder %s20, 3
      %p85 = por %p83, %p84
      %p86 = scmp.ne.s32.totalorder %s75, %s76
      %p87 = scmp.eq.s32.totalorder %s20, 0
      %p88 = por %p86, %p87
      %p89 = scmp.ne.s32.totalorder %s75, %s76
      %p90 = scmp.eq.s32.totalorder %s21, 3
      %p91 = por %p89, %p90
      %p93 = scmp.ne.s32.totalorder %s76, %s92
      %p94 = scmp.eq.s32.totalorder %s21, 0
      %p95 = por %p93, %p94
      %p96 = scmp.le.s32.totalorder 1, %s15
      %p97 = scmp.lt.s32.totalorder %s15, 5
      %p98 = pnand %p96, %p97
      %p99 = pneg %p98
      // Predicated region
      $region9: #{tpu_custom_call.1} parent=5 // pred_check
        _
      $region10: #{tpu_custom_call.1} parent=5 // pred_check_branch
        %101 = sbr.rel (%p98) target = $region12
      $region11: #{tpu_custom_call.1} parent=5 // pred_region
        %s102 = ssub.s32 %s15, 1
        // Predicated region
        $region13: #{tpu_custom_call.1} parent=11 // pred_check
          %p103 = pneg %p62
        $region14: #{tpu_custom_call.1} parent=11 // pred_check_branch
          %105 = sbr.rel (%p103) target = $region16
        $region15: #{tpu_custom_call.1} parent=11 // pred_region
          %s107 = ssub.s32 32, 32
          %108 = vsyncadd [#allocation6], %s107
          %s110 = sshll.u32 [#allocation5], 4
          %s111 = int_to_ptr.vmem [resolvable:$true] %s110
          %113 = dma.hbm_to_vmem [thread:$0]  %s1, 32, %s111, [#allocation6]
        $region16: #{tpu_custom_call.1} parent=11 // pred_fallthru
          _
      $region12: #{tpu_custom_call.1} parent=5 // pred_fallthru
        _
      %p114 = scmp.lt.s32.totalorder %s15, 4
      // Predicated region
      $region17: #{tpu_custom_call.1} parent=5 // pred_check
        %p115 = pneg %p114
      $region18: #{tpu_custom_call.1} parent=5 // pred_check_branch
        %117 = sbr.rel (%p115) target = $region20
      $region19: #{tpu_custom_call.1} parent=5 // pred_region
        // Predicated region
        $region21: #{tpu_custom_call.1} parent=19 // pred_check
          %p118 = pneg %p35
        $region22: #{tpu_custom_call.1} parent=19 // pred_check_branch
          %120 = sbr.rel (%p118) target = $region24
        $region23: #{tpu_custom_call.1} parent=19 // pred_region
          %s121 = sand.u32 %s25, 1
          %s122 = scalar_lea.sflag [#allocation3], %s121
          %s123 = sand.u32 %s25, 1
          %s124 = smul.addr %s123, 512
          %s125 = scalar_lea.vmem [#allocation2], %s124
          %s126 = smul.u32 64, %s15
          %s128 = ssub.s32 8192, 8192
          %129 = vsyncadd %s122, %s128
          %s130 = smul.addr %s126, 128
          %s131 = scalar_lea.hbm %s0, %s130
          %s132 = sshll.u32 %s125, 4
          %s133 = int_to_ptr.vmem [resolvable:$true] %s132
          %138 = dma.hbm_to_vmem [thread:$0]  %s131, 8192, %s133, %s122, 128, 128, 8
        $region24: #{tpu_custom_call.1} parent=19 // pred_fallthru
          _
      $region20: #{tpu_custom_call.1} parent=5 // pred_fallthru
        _
      %p139 = scmp.le.s32.totalorder 1, %s15
      %p140 = scmp.lt.s32.totalorder %s15, 5
      %p141 = pnand %p139, %p140
      %p142 = pneg %p141
      // Predicated region
      $region25: #{tpu_custom_call.1} parent=5 // pred_check
        _
      $region26: #{tpu_custom_call.1} parent=5 // pred_check_branch
        %144 = sbr.rel (%p141) target = $region28
      $region27: #{tpu_custom_call.1} parent=5 // pred_region
        %s145 = ssub.s32 %s15, 1
        %s146 = sand.u32 %s28, 1
        %s147 = scalar_lea.sflag [#allocation3], %s146
        %s148 = sand.u32 %s28, 1
        %s149 = smul.addr %s148, 512
        %s150 = scalar_lea.vmem [#allocation2], %s149
        // Predicated region
        $region29: #{tpu_custom_call.1} parent=27 // pred_check
          %p151 = pneg %p41
        $region30: #{tpu_custom_call.1} parent=27 // pred_check_branch
          %153 = sbr.rel (%p151) target = $region32
        $region31: #{tpu_custom_call.1} parent=27 // pred_region
          %154 = dma.done %s147, 8192
        $region32: #{tpu_custom_call.1} parent=27 // pred_fallthru
          _
        // Predicated region
        $region33: #{tpu_custom_call.1} parent=27 // pred_check
          %p155 = pneg %p62
        $region34: #{tpu_custom_call.1} parent=27 // pred_check_branch
          %157 = sbr.rel (%p155) target = $region36
        $region35: #{tpu_custom_call.1} parent=27 // pred_region
          %158 = dma.done [#allocation6], 32
        $region36: #{tpu_custom_call.1} parent=27 // pred_fallthru
          _
        %s159 = sand.u32 %s28, 1
        %s160 = scalar_lea.sflag [#allocation3], %s159
        %s161 = sand.u32 %s28, 1
        %s162 = smul.addr %s161, 512
        %s163 = scalar_lea.vmem [#allocation2], %s162
        %p164 = pneg %p41
        %p165 = pneg %p38
        %p166 = pneg %p62
        %p167 = pneg %p59
        %p168 = pneg %p88
        %p169 = pneg %p85
        %s170 = sand.u32 %s75, 1
        %s171 = scalar_lea.sflag [#allocation4], %s170
        %s172 = sand.u32 %s75, 1
        %s173 = smul.addr %s172, 512
        %s174 = scalar_lea.vmem [#allocation7], %s173
        %s175 = smul.u32 64, %s20
        %s176 = smul.u32 64, %s20
        %v177 = vld [vmem:[%s150] sm:$0xff]
        %v178 = vld [vmem:[%s150 + $0x8] sm:$0xff]
        %v179 = vld [vmem:[%s150 + $0x10] sm:$0xff]
        %v180 = vld [vmem:[%s150 + $0x18] sm:$0xff]
        %v181 = vld [vmem:[%s150 + $0x20] sm:$0xff]
        %v182 = vld [vmem:[%s150 + $0x28] sm:$0xff]
        %v183 = vld [vmem:[%s150 + $0x30] sm:$0xff]
        %v184 = vld [vmem:[%s150 + $0x38] sm:$0xff]
        %v185 = vld [vmem:[%s150 + $0x40] sm:$0xff]
        %v186 = vld [vmem:[%s150 + $0x48] sm:$0xff]
        %v187 = vld [vmem:[%s150 + $0x50] sm:$0xff]
        %v188 = vld [vmem:[%s150 + $0x58] sm:$0xff]
        %v189 = vld [vmem:[%s150 + $0x60] sm:$0xff]
        %v190 = vld [vmem:[%s150 + $0x68] sm:$0xff]
        %v191 = vld [vmem:[%s150 + $0x70] sm:$0xff]
        %v192 = vld [vmem:[%s150 + $0x78] sm:$0xff]
        %v193 = vld [vmem:[%s150 + $0x80] sm:$0xff]
        %v194 = vld [vmem:[%s150 + $0x88] sm:$0xff]
        %v195 = vld [vmem:[%s150 + $0x90] sm:$0xff]
        %v196 = vld [vmem:[%s150 + $0x98] sm:$0xff]
        %v197 = vld [vmem:[%s150 + $0xa0] sm:$0xff]
        %v198 = vld [vmem:[%s150 + $0xa8] sm:$0xff]
        %v199 = vld [vmem:[%s150 + $0xb0] sm:$0xff]
        %v200 = vld [vmem:[%s150 + $0xb8] sm:$0xff]
        %v201 = vld [vmem:[%s150 + $0xc0] sm:$0xff]
        %v202 = vld [vmem:[%s150 + $0xc8] sm:$0xff]
        %v203 = vld [vmem:[%s150 + $0xd0] sm:$0xff]
        %v204 = vld [vmem:[%s150 + $0xd8] sm:$0xff]
        %v205 = vld [vmem:[%s150 + $0xe0] sm:$0xff]
        %v206 = vld [vmem:[%s150 + $0xe8] sm:$0xff]
        %v207 = vld [vmem:[%s150 + $0xf0] sm:$0xff]
        %v208 = vld [vmem:[%s150 + $0xf8] sm:$0xff]
        %v209 = vld [vmem:[%s150 + $0x100] sm:$0xff]
        %v210 = vld [vmem:[%s150 + $0x108] sm:$0xff]
        %v211 = vld [vmem:[%s150 + $0x110] sm:$0xff]
        %v212 = vld [vmem:[%s150 + $0x118] sm:$0xff]
        %v213 = vld [vmem:[%s150 + $0x120] sm:$0xff]
        %v214 = vld [vmem:[%s150 + $0x128] sm:$0xff]
        %v215 = vld [vmem:[%s150 + $0x130] sm:$0xff]
        %v216 = vld [vmem:[%s150 + $0x138] sm:$0xff]
        %v217 = vld [vmem:[%s150 + $0x140] sm:$0xff]
        %v218 = vld [vmem:[%s150 + $0x148] sm:$0xff]
        %v219 = vld [vmem:[%s150 + $0x150] sm:$0xff]
        %v220 = vld [vmem:[%s150 + $0x158] sm:$0xff]
        %v221 = vld [vmem:[%s150 + $0x160] sm:$0xff]
        %v222 = vld [vmem:[%s150 + $0x168] sm:$0xff]
        %v223 = vld [vmem:[%s150 + $0x170] sm:$0xff]
        %v224 = vld [vmem:[%s150 + $0x178] sm:$0xff]
        %v225 = vld [vmem:[%s150 + $0x180] sm:$0xff]
        %v226 = vld [vmem:[%s150 + $0x188] sm:$0xff]
        %v227 = vld [vmem:[%s150 + $0x190] sm:$0xff]
        %v228 = vld [vmem:[%s150 + $0x198] sm:$0xff]
        %v229 = vld [vmem:[%s150 + $0x1a0] sm:$0xff]
        %v230 = vld [vmem:[%s150 + $0x1a8] sm:$0xff]
        %v231 = vld [vmem:[%s150 + $0x1b0] sm:$0xff]
        %v232 = vld [vmem:[%s150 + $0x1b8] sm:$0xff]
        %v233 = vld [vmem:[%s150 + $0x1c0] sm:$0xff]
        %v234 = vld [vmem:[%s150 + $0x1c8] sm:$0xff]
        %v235 = vld [vmem:[%s150 + $0x1d0] sm:$0xff]
        %v236 = vld [vmem:[%s150 + $0x1d8] sm:$0xff]
        %v237 = vld [vmem:[%s150 + $0x1e0] sm:$0xff]
        %v238 = vld [vmem:[%s150 + $0x1e8] sm:$0xff]
        %v239 = vld [vmem:[%s150 + $0x1f0] sm:$0xff]
        %v240 = vld [vmem:[%s150 + $0x1f8] sm:$0xff]
        %v241 = vld [vmem:[#allocation5] sm:$0x1]
        %v242 = vlaneseq
        %v243 = vshrl.u32 %v242, 7
        %v244 = vsub.s32 0, %v243
        %v245 = vrot.slane %v241, %v244
        %v246 = vmul.f32 %v177, %v245
        %v247 = vmul.f32 %v178, %v245
        %v248 = vmul.f32 %v179, %v245
        %v249 = vmul.f32 %v180, %v245
        %v250 = vmul.f32 %v181, %v245
        %v251 = vmul.f32 %v182, %v245
        %v252 = vmul.f32 %v183, %v245
        %v253 = vmul.f32 %v184, %v245
        %v254 = vmul.f32 %v185, %v245
        %v255 = vmul.f32 %v186, %v245
        %v256 = vmul.f32 %v187, %v245
        %v257 = vmul.f32 %v188, %v245
        %v258 = vmul.f32 %v189, %v245
        %v259 = vmul.f32 %v190, %v245
        %v260 = vmul.f32 %v191, %v245
        %v261 = vmul.f32 %v192, %v245
        %v262 = vmul.f32 %v193, %v245
        %v263 = vmul.f32 %v194, %v245
        %v264 = vmul.f32 %v195, %v245
        %v265 = vmul.f32 %v196, %v245
        %v266 = vmul.f32 %v197, %v245
        %v267 = vmul.f32 %v198, %v245
        %v268 = vmul.f32 %v199, %v245
        %v269 = vmul.f32 %v200, %v245
        %v270 = vmul.f32 %v201, %v245
        %v271 = vmul.f32 %v202, %v245
        %v272 = vmul.f32 %v203, %v245
        %v273 = vmul.f32 %v204, %v245
        %v274 = vmul.f32 %v205, %v245
        %v275 = vmul.f32 %v206, %v245
        %v276 = vmul.f32 %v207, %v245
        %v277 = vmul.f32 %v208, %v245
        %v278 = vmul.f32 %v209, %v245
        %v279 = vmul.f32 %v210, %v245
        %v280 = vmul.f32 %v211, %v245
        %v281 = vmul.f32 %v212, %v245
        %v282 = vmul.f32 %v213, %v245
        %v283 = vmul.f32 %v214, %v245
        %v284 = vmul.f32 %v215, %v245
        %v285 = vmul.f32 %v216, %v245
        %v286 = vmul.f32 %v217, %v245
        %v287 = vmul.f32 %v218, %v245
        %v288 = vmul.f32 %v219, %v245
        %v289 = vmul.f32 %v220, %v245
        %v290 = vmul.f32 %v221, %v245
        %v291 = vmul.f32 %v222, %v245
        %v292 = vmul.f32 %v223, %v245
        %v293 = vmul.f32 %v224, %v245
        %v294 = vmul.f32 %v225, %v245
        %v295 = vmul.f32 %v226, %v245
        %v296 = vmul.f32 %v227, %v245
        %v297 = vmul.f32 %v228, %v245
        %v298 = vmul.f32 %v229, %v245
        %v299 = vmul.f32 %v230, %v245
        %v300 = vmul.f32 %v231, %v245
        %v301 = vmul.f32 %v232, %v245
        %v302 = vmul.f32 %v233, %v245
        %v303 = vmul.f32 %v234, %v245
        %v304 = vmul.f32 %v235, %v245
        %v305 = vmul.f32 %v236, %v245
        %v306 = vmul.f32 %v237, %v245
        %v307 = vmul.f32 %v238, %v245
        %v308 = vmul.f32 %v239, %v245
        %v309 = vmul.f32 %v240, %v245
        %v310 = vld [vmem:[#allocation5 + $0x1] sm:$0x1]
        %v311 = vlaneseq
        %v312 = vshrl.u32 %v311, 7
        %v313 = vsub.s32 0, %v312
        %v314 = vrot.slane %v310, %v313
        %v315 = vadd.f32 %v246, %v314
        %v316 = vadd.f32 %v247, %v314
        %v317 = vadd.f32 %v248, %v314
        %v318 = vadd.f32 %v249, %v314
        %v319 = vadd.f32 %v250, %v314
        %v320 = vadd.f32 %v251, %v314
        %v321 = vadd.f32 %v252, %v314
        %v322 = vadd.f32 %v253, %v314
        %v323 = vadd.f32 %v254, %v314
        %v324 = vadd.f32 %v255, %v314
        %v325 = vadd.f32 %v256, %v314
        %v326 = vadd.f32 %v257, %v314
        %v327 = vadd.f32 %v258, %v314
        %v328 = vadd.f32 %v259, %v314
        %v329 = vadd.f32 %v260, %v314
        %v330 = vadd.f32 %v261, %v314
        %v331 = vadd.f32 %v262, %v314
        %v332 = vadd.f32 %v263, %v314
        %v333 = vadd.f32 %v264, %v314
        %v334 = vadd.f32 %v265, %v314
        %v335 = vadd.f32 %v266, %v314
        %v336 = vadd.f32 %v267, %v314
        %v337 = vadd.f32 %v268, %v314
        %v338 = vadd.f32 %v269, %v314
        %v339 = vadd.f32 %v270, %v314
        %v340 = vadd.f32 %v271, %v314
        %v341 = vadd.f32 %v272, %v314
        %v342 = vadd.f32 %v273, %v314
        %v343 = vadd.f32 %v274, %v314
        %v344 = vadd.f32 %v275, %v314
        %v345 = vadd.f32 %v276, %v314
        %v346 = vadd.f32 %v277, %v314
        %v347 = vadd.f32 %v278, %v314
        %v348 = vadd.f32 %v279, %v314
        %v349 = vadd.f32 %v280, %v314
        %v350 = vadd.f32 %v281, %v314
        %v351 = vadd.f32 %v282, %v314
        %v352 = vadd.f32 %v283, %v314
        %v353 = vadd.f32 %v284, %v314
        %v354 = vadd.f32 %v285, %v314
        %v355 = vadd.f32 %v286, %v314
        %v356 = vadd.f32 %v287, %v314
        %v357 = vadd.f32 %v288, %v314
        %v358 = vadd.f32 %v289, %v314
        %v359 = vadd.f32 %v290, %v314
        %v360 = vadd.f32 %v291, %v314
        %v361 = vadd.f32 %v292, %v314
        %v362 = vadd.f32 %v293, %v314
        %v363 = vadd.f32 %v294, %v314
        %v364 = vadd.f32 %v295, %v314
        %v365 = vadd.f32 %v296, %v314
        %v366 = vadd.f32 %v297, %v314
        %v367 = vadd.f32 %v298, %v314
        %v368 = vadd.f32 %v299, %v314
        %v369 = vadd.f32 %v300, %v314
        %v370 = vadd.f32 %v301, %v314
        %v371 = vadd.f32 %v302, %v314
        %v372 = vadd.f32 %v303, %v314
        %v373 = vadd.f32 %v304, %v314
        %v374 = vadd.f32 %v305, %v314
        %v375 = vadd.f32 %v306, %v314
        %v376 = vadd.f32 %v307, %v314
        %v377 = vadd.f32 %v308, %v314
        %v378 = vadd.f32 %v309, %v314
        %379 = vst [vmem:[%s174] sm:$0xff] %v315
        %380 = vst [vmem:[%s174 + $0x8] sm:$0xff] %v316
        %381 = vst [vmem:[%s174 + $0x10] sm:$0xff] %v317
        %382 = vst [vmem:[%s174 + $0x18] sm:$0xff] %v318
        %383 = vst [vmem:[%s174 + $0x20] sm:$0xff] %v319
        %384 = vst [vmem:[%s174 + $0x28] sm:$0xff] %v320
        %385 = vst [vmem:[%s174 + $0x30] sm:$0xff] %v321
        %386 = vst [vmem:[%s174 + $0x38] sm:$0xff] %v322
        %387 = vst [vmem:[%s174 + $0x40] sm:$0xff] %v323
        %388 = vst [vmem:[%s174 + $0x48] sm:$0xff] %v324
        %389 = vst [vmem:[%s174 + $0x50] sm:$0xff] %v325
        %390 = vst [vmem:[%s174 + $0x58] sm:$0xff] %v326
        %391 = vst [vmem:[%s174 + $0x60] sm:$0xff] %v327
        %392 = vst [vmem:[%s174 + $0x68] sm:$0xff] %v328
        %393 = vst [vmem:[%s174 + $0x70] sm:$0xff] %v329
        %394 = vst [vmem:[%s174 + $0x78] sm:$0xff] %v330
        %395 = vst [vmem:[%s174 + $0x80] sm:$0xff] %v331
        %396 = vst [vmem:[%s174 + $0x88] sm:$0xff] %v332
        %397 = vst [vmem:[%s174 + $0x90] sm:$0xff] %v333
        %398 = vst [vmem:[%s174 + $0x98] sm:$0xff] %v334
        %399 = vst [vmem:[%s174 + $0xa0] sm:$0xff] %v335
        %400 = vst [vmem:[%s174 + $0xa8] sm:$0xff] %v336
        %401 = vst [vmem:[%s174 + $0xb0] sm:$0xff] %v337
        %402 = vst [vmem:[%s174 + $0xb8] sm:$0xff] %v338
        %403 = vst [vmem:[%s174 + $0xc0] sm:$0xff] %v339
        %404 = vst [vmem:[%s174 + $0xc8] sm:$0xff] %v340
        %405 = vst [vmem:[%s174 + $0xd0] sm:$0xff] %v341
        %406 = vst [vmem:[%s174 + $0xd8] sm:$0xff] %v342
        %407 = vst [vmem:[%s174 + $0xe0] sm:$0xff] %v343
        %408 = vst [vmem:[%s174 + $0xe8] sm:$0xff] %v344
        %409 = vst [vmem:[%s174 + $0xf0] sm:$0xff] %v345
        %410 = vst [vmem:[%s174 + $0xf8] sm:$0xff] %v346
        %411 = vst [vmem:[%s174 + $0x100] sm:$0xff] %v347
        %412 = vst [vmem:[%s174 + $0x108] sm:$0xff] %v348
        %413 = vst [vmem:[%s174 + $0x110] sm:$0xff] %v349
        %414 = vst [vmem:[%s174 + $0x118] sm:$0xff] %v350
        %415 = vst [vmem:[%s174 + $0x120] sm:$0xff] %v351
        %416 = vst [vmem:[%s174 + $0x128] sm:$0xff] %v352
        %417 = vst [vmem:[%s174 + $0x130] sm:$0xff] %v353
        %418 = vst [vmem:[%s174 + $0x138] sm:$0xff] %v354
        %419 = vst [vmem:[%s174 + $0x140] sm:$0xff] %v355
        %420 = vst [vmem:[%s174 + $0x148] sm:$0xff] %v356
        %421 = vst [vmem:[%s174 + $0x150] sm:$0xff] %v357
        %422 = vst [vmem:[%s174 + $0x158] sm:$0xff] %v358
        %423 = vst [vmem:[%s174 + $0x160] sm:$0xff] %v359
        %424 = vst [vmem:[%s174 + $0x168] sm:$0xff] %v360
        %425 = vst [vmem:[%s174 + $0x170] sm:$0xff] %v361
        %426 = vst [vmem:[%s174 + $0x178] sm:$0xff] %v362
        %427 = vst [vmem:[%s174 + $0x180] sm:$0xff] %v363
        %428 = vst [vmem:[%s174 + $0x188] sm:$0xff] %v364
        %429 = vst [vmem:[%s174 + $0x190] sm:$0xff] %v365
        %430 = vst [vmem:[%s174 + $0x198] sm:$0xff] %v366
        %431 = vst [vmem:[%s174 + $0x1a0] sm:$0xff] %v367
        %432 = vst [vmem:[%s174 + $0x1a8] sm:$0xff] %v368
        %433 = vst [vmem:[%s174 + $0x1b0] sm:$0xff] %v369
        %434 = vst [vmem:[%s174 + $0x1b8] sm:$0xff] %v370
        %435 = vst [vmem:[%s174 + $0x1c0] sm:$0xff] %v371
        %436 = vst [vmem:[%s174 + $0x1c8] sm:$0xff] %v372
        %437 = vst [vmem:[%s174 + $0x1d0] sm:$0xff] %v373
        %438 = vst [vmem:[%s174 + $0x1d8] sm:$0xff] %v374
        %439 = vst [vmem:[%s174 + $0x1e0] sm:$0xff] %v375
        %440 = vst [vmem:[%s174 + $0x1e8] sm:$0xff] %v376
        %441 = vst [vmem:[%s174 + $0x1f0] sm:$0xff] %v377
        %442 = vst [vmem:[%s174 + $0x1f8] sm:$0xff] %v378
        %s443 = sand.u32 %s75, 1
        %s444 = scalar_lea.sflag [#allocation4], %s443
        %s445 = sand.u32 %s75, 1
        %s446 = smul.addr %s445, 512
        %s447 = scalar_lea.vmem [#allocation7], %s446
        // Predicated region
        $region37: #{tpu_custom_call.1} parent=27 // pred_check
          %p448 = pneg %p85
        $region38: #{tpu_custom_call.1} parent=27 // pred_check_branch
          %450 = sbr.rel (%p448) target = $region40
        $region39: #{tpu_custom_call.1} parent=27 // pred_region
          %s451 = smul.u32 64, %s20
          %s453 = ssub.s32 8192, 8192
          %454 = vsyncadd %s444, %s453
          %s455 = smul.addr %s451, 128
          %s456 = scalar_lea.hbm %s2, %s455
          %s457 = sshll.u32 %s447, 4
          %s458 = int_to_ptr.vmem [resolvable:$true] %s457
          %463 = dma.vmem_to_hbm [thread:$0]  %s458, 8192, %s456, %s444, 128, 128, 8
        $region40: #{tpu_custom_call.1} parent=27 // pred_fallthru
          _
      $region28: #{tpu_custom_call.1} parent=5 // pred_fallthru
        _
      %p464 = scmp.le.s32.totalorder 2, %s15
      // Predicated region
      $region41: #{tpu_custom_call.1} parent=5 // pred_check
        %p465 = pneg %p464
      $region42: #{tpu_custom_call.1} parent=5 // pred_check_branch
        %467 = sbr.rel (%p465) target = $region44
      $region43: #{tpu_custom_call.1} parent=5 // pred_region
        %s468 = ssub.s32 %s15, 2
        // Predicated region
        $region45: #{tpu_custom_call.1} parent=43 // pred_check
          %p469 = pneg %p91
        $region46: #{tpu_custom_call.1} parent=43 // pred_check_branch
          %471 = sbr.rel (%p469) target = $region48
        $region47: #{tpu_custom_call.1} parent=43 // pred_region
          %s472 = sand.u32 %s76, 1
          %s473 = scalar_lea.sflag [#allocation4], %s472
          %s474 = sand.u32 %s76, 1
          %s475 = smul.addr %s474, 512
          %s476 = scalar_lea.vmem [#allocation7], %s475
          %477 = dma.done %s473, 8192
        $region48: #{tpu_custom_call.1} parent=43 // pred_fallthru
          _
      $region44: #{tpu_custom_call.1} parent=5 // pred_fallthru
        _
    $region6: #{tpu_custom_call.1} parent=1 // loop_footer
      %s19 = sadd.s32 1, %s15
    $region7: #{tpu_custom_call.1} parent=1 // loop_footer_branch
      %14 = sbr.rel target = $region3
    $region8: #{tpu_custom_call.1} parent=1 // loop_exit
      _
    %478 = vsyncpa [#allocation3], 1
    %s479 = scalar_lea.sflag [#allocation3], 1
    %480 = vsyncpa %s479, 1
    %481 = vsyncpa [#allocation6], 1
    %482 = vsyncpa [#allocation4], 1
    %s483 = scalar_lea.sflag [#allocation4], 1
    %484 = vsyncpa %s483, 1

</llo_original>
